<compile_context>
chip_gen: v7x
topology: tpu7x:2x2x1
jax: 0.10.0
libtpu: 0.0.40
codegen_flags: <defaults>
</compile_context>

<pallas_src>
import functools

import jax
import jax.numpy as jnp
from jax import lax
from jax.experimental import pallas as pl
from jax.experimental.pallas import tpu as pltpu


# -----------------------------------------------------------------------------
# Generation-aware VMEM budget / tile caps
# -----------------------------------------------------------------------------
def _round_up(x, m):
    return (x + m - 1) // m * m


def _vmem_budget():
    """Returns (scoped vmem limit bytes, q-tile cap, linear row-tile cap)."""
    phys = 64 * 1024 * 1024          # conservative default (v7x-class)
    kind = ""
    try:
        kind = (jax.devices()[0].device_kind or "").lower()
    except Exception:
        pass
    try:
        phys = int(pltpu.get_tpu_info().vmem_capacity_bytes)
    except Exception:
        pass
    if phys <= 64 * 1024 * 1024:
        # v7x-class: 64 MiB/TC -> ~36 MiB scoped leaves headroom for compiler
        # scratch and the double-buffered weights output.
        return 36 * 1024 * 1024, 256, 512
    if "v5" in kind:
        # v5e: 128 MiB VMEM but a 128-wide MXU -> tq beyond 128 only burns VMEM
        # on [TQ,Lk] probability tiles without feeding the MXU any better.
        return 100 * 1024 * 1024, 128, 1024
    # v6e / other 128 MiB parts: large tiles amortize per-grid-step overhead.
    return 100 * 1024 * 1024, 512, 1024


def _pick_tile(n, cap, fits):
    """Largest 8-aligned tile <= cap that fits the VMEM budget and pads n by <~10%."""
    waste_cap = max(_round_up(max(n, 1), 8), int(n * 1.1) + 7)
    for t in (1024, 512, 256, 128, 64, 32, 16, 8):
        if t > cap or not fits(t):
            continue
        if _round_up(n, t) <= waste_cap:
            return t
    return 8


# -----------------------------------------------------------------------------
# Linear projection kernel:  y = x @ W^T + b  (weights pre-transposed + bf16)
# -----------------------------------------------------------------------------
def _linear_kernel(x_ref, w_ref, b_ref, o_ref):
    x = x_ref[...].astype(jnp.bfloat16)                       # [TM, Hin]
    y = jnp.dot(x, w_ref[...], preferred_element_type=jnp.float32)
    o_ref[...] = (y + b_ref[...]).astype(o_ref.dtype)


def _choose_out_tile(hout):
    for t in (1024, 512, 256, 128):
        if hout % t == 0:
            return t
    return hout  # small / odd Hout: full dim is always a legal block


def linear(x, w_t_bf16, b, out_dtype=jnp.bfloat16):
    """y = x @ W^T + b with W pre-transposed to [Hin, Hout] bf16."""
    B, L, Hin = x.shape
    Hout = w_t_bf16.shape[1]
    rows = B * L
    vmem_limit, _, row_cap = _vmem_budget()
    tn = _choose_out_tile(Hout)

    def fits(tm):
        # x / w / b / y blocks, double-buffered (x counted at 4B to cover f32 input).
        return 2 * (tm * Hin * 4 + Hin * tn * 2 + tn * 4 + tm * tn * 4) <= vmem_limit

    tm = _pick_tile(rows, row_cap, fits)
    rows_pad = _round_up(rows, tm)
    x2 = x.reshape(rows, Hin)
    if rows_pad != rows:
        x2 = jnp.pad(x2, ((0, rows_pad - rows), (0, 0)))

    # TODO(synk): tile the contraction axis with a VMEM f32 accumulator for huge Hin.
    y = pl.pallas_call(
        _linear_kernel,
        out_shape=jax.ShapeDtypeStruct((rows_pad, Hout), out_dtype),
        grid=(rows_pad // tm, Hout // tn),
        in_specs=[
            pl.BlockSpec((tm, Hin), lambda i, j: (i, 0)),
            pl.BlockSpec((Hin, tn), lambda i, j: (0, j)),
            pl.BlockSpec((1, tn), lambda i, j: (0, j)),
        ],
        out_specs=pl.BlockSpec((tm, tn), lambda i, j: (i, j)),
        compiler_params=pltpu.CompilerParams(
            dimension_semantics=("parallel", "parallel"),
            vmem_limit_bytes=vmem_limit,
        ),
    )(x2, w_t_bf16, b.reshape(1, Hout))
    return y[:rows].reshape(B, L, Hout)


# -----------------------------------------------------------------------------
# Per (batch, head) clustering + per q-tile sparse attention
# -----------------------------------------------------------------------------
def _sqa_kernel(q_ref, k_ref, v_ref, c_ref, o_ref, w_ref, cc_sc, a_sc,
                *, scale, top_k):
    qi = pl.program_id(2)
    C = c_ref.shape[1]
    Lk = k_ref.shape[2]
    eps2 = jnp.float32(1e-24)       # (F.normalize eps = 1e-12) squared
    neg_big = jnp.float32(-1e30)    # finite mask value (NaN-safe, unlike -inf)

    # ---- clustering stage: K-only, runs once per (batch, head) --------------
    @pl.when(qi == 0)
    def _cluster():
        # f32 math end-to-end so argmax ties and cluster means track the f32
        # reference as closely as bf16 activations allow.
        k_h = k_ref[0, 0].astype(jnp.float32)                       # [Lk, hd]
        cent = c_ref[0]                                             # [C, hd] f32
        k_n = k_h * lax.rsqrt(jnp.maximum(
            jnp.sum(k_h * k_h, axis=-1, keepdims=True), eps2))
        c_n = cent * lax.rsqrt(jnp.maximum(
            jnp.sum(cent * cent, axis=-1, keepdims=True), eps2))
        sim = jnp.einsum("cd,ld->cl", c_n, k_n,
                         preferred_element_type=jnp.float32)        # [C, Lk]
        iota_cl = lax.broadcasted_iota(jnp.int32, (C, Lk), 0)
        sim_max = jnp.max(sim, axis=0, keepdims=True)               # [1, Lk]
        assign = jnp.min(jnp.where(sim == sim_max, iota_cl, C),
                         axis=0, keepdims=True)                     # [1, Lk]
        a_onehot = (iota_cl == assign).astype(jnp.float32)          # [C, Lk]
        counts = jnp.sum(a_onehot, axis=1, keepdims=True)           # [C, 1]
        ksum = jnp.einsum("cl,ld->cd", a_onehot, k_h,
                          preferred_element_type=jnp.float32)       # [C, hd]
        # cluster centroid = mean of assigned keys; fallback = raw centroid
        cc = jnp.where(counts > 0, ksum / jnp.maximum(counts, 1.0), cent)
        cc_sc[...] = cc.astype(jnp.bfloat16)
        a_sc[...] = a_onehot.astype(jnp.bfloat16)    # 0/1, exact in bf16

    # ---- per (batch, head, q-tile) sparse attention --------------------------
    q_h = q_ref[0, 0]                                               # [TQ, hd] bf16
    k_h = k_ref[0, 0]                                               # [Lk, hd] bf16
    v_h = v_ref[0, 0]                                               # [Lk, hd] bf16

    scores = jnp.einsum("qd,cd->qc", q_h, cc_sc[...],
                        preferred_element_type=jnp.float32) * scale  # [TQ, C]
    qk = jnp.einsum("qd,kd->qk", q_h, k_h,
                    preferred_element_type=jnp.float32) * scale      # [TQ, Lk]

    # rank-based top-k cluster selection (ties -> lowest index), int32 rank so
    # no f32 [TQ,C,C] cube is materialized.
    si = scores[:, :, None]
    sj = scores[:, None, :]
    ci = lax.broadcasted_iota(jnp.int32, (1, C, C), 1)
    cj = lax.broadcasted_iota(jnp.int32, (1, C, C), 2)
    better = (sj > si) | ((sj == si) & (cj < ci))
    rank = jnp.sum(better.astype(jnp.int32), axis=-1)               # [TQ, C] int32
    sel = (rank < top_k).astype(jnp.bfloat16)                       # [TQ, C]

    # token mask: token allowed iff its cluster is selected (exactly 0/1)
    tmask = jnp.dot(sel, a_sc[...], preferred_element_type=jnp.float32)  # [TQ, Lk]
    row_has = jnp.sum(tmask, axis=-1, keepdims=True) > 0.0
    tmask = jnp.where(row_has, tmask, 1.0)   # fallback: attend to all tokens

    # masked softmax: masked logits get a large finite negative, so exp underflows
    # to exactly 0 and the stored weights are exactly 0 off-cluster (as in torch).
    qk = jnp.where(tmask > 0.5, qk, neg_big)
    m = jnp.max(qk, axis=-1, keepdims=True)
    p = jnp.exp(qk - m)
    w = p / jnp.sum(p, axis=-1, keepdims=True)  # exact divide: weights are returned

    w_ref[0, 0] = w
    out = jnp.dot(w.astype(jnp.bfloat16), v_h,
                  preferred_element_type=jnp.float32)               # [TQ, hd]
    o_ref[0, 0] = out.astype(o_ref.dtype)


def _attn_step_bytes(tq, lk, hd, C):
    db = 2  # Pallas double-buffers every pipelined block by default
    blocks = db * (2 * tq * hd * 2        # q in + merged out (bf16)
                   + 2 * lk * hd * 2      # K, V residents (bf16)
                   + C * hd * 4           # centroids (f32)
                   + tq * lk * 4)         # attention-weights out (f32)
    scratch = C * hd * 2 + C * lk * 2
    temps = 8 * tq * lk * 4 + tq * C * C * 4   # f32 softmax temporaries + top-k work
    return blocks + scratch + temps


def sqa_attention(q, k, v, centroids, scale, top_k, num_heads):
    B, Lq, H = q.shape
    Lk = k.shape[1]
    nh = num_heads
    hd = H // nh
    C = centroids.shape[1]
    vmem_limit, q_cap, _ = _vmem_budget()
    tq = _pick_tile(Lq, q_cap,
                    lambda t: _attn_step_bytes(t, Lk, hd, C) <= vmem_limit)
    Lq_pad = _round_up(Lq, tq)

    # Head-major [B, nh, L, hd]: one cheap, bandwidth-bound XLA transpose per
    # activation buys lane-dense per-head blocks, a head grid axis, nh-times
    # smaller scratch and bounded per-head live ranges in the kernel.
    qh = q.reshape(B, Lq, nh, hd).transpose(0, 2, 1, 3)
    kh = k.reshape(B, Lk, nh, hd).transpose(0, 2, 1, 3)
    vh = v.reshape(B, Lk, nh, hd).transpose(0, 2, 1, 3)
    if Lq_pad != Lq:
        qh = jnp.pad(qh, ((0, 0), (0, 0), (0, Lq_pad - Lq), (0, 0)))

    kern = functools.partial(_sqa_kernel, scale=scale, top_k=top_k)
    out_h, w = pl.pallas_call(
        kern,
        out_shape=(
            jax.ShapeDtypeStruct((B, nh, Lq_pad, hd), jnp.bfloat16),  # head outputs
            jax.ShapeDtypeStruct((B, nh, Lq_pad, Lk), jnp.float32),   # attn weights
        ),
        grid=(B, nh, Lq_pad // tq),
        in_specs=[
            pl.BlockSpec((1, 1, tq, hd), lambda b, h, i: (b, h, i, 0)),   # q tile
            pl.BlockSpec((1, 1, Lk, hd), lambda b, h, i: (b, h, 0, 0)),   # K resident
            pl.BlockSpec((1, 1, Lk, hd), lambda b, h, i: (b, h, 0, 0)),   # V resident
            pl.BlockSpec((1, C, hd), lambda b, h, i: (h, 0, 0)),          # centroids
        ],
        out_specs=(
            pl.BlockSpec((1, 1, tq, hd), lambda b, h, i: (b, h, i, 0)),
            pl.BlockSpec((1, 1, tq, Lk), lambda b, h, i: (b, h, i, 0)),
        ),
        scratch_shapes=[
            pltpu.VMEM((C, hd), jnp.bfloat16),   # cluster means for current (b,h)
            pltpu.VMEM((C, Lk), jnp.bfloat16),   # one-hot cluster assignments
        ],
        compiler_params=pltpu.CompilerParams(
            dimension_semantics=("parallel", "parallel", "arbitrary"),
            vmem_limit_bytes=vmem_limit,
        ),
    )(qh, kh, vh, centroids)

    merged = out_h[:, :, :Lq].transpose(0, 2, 1, 3).reshape(B, Lq, H)
    return merged, w[:, :, :Lq, :]


# -----------------------------------------------------------------------------
# Full module forward (glue in plain JAX, hot paths in the kernels above)
# -----------------------------------------------------------------------------
def sub_quadratic_attention_forward(params, query, key, value,
                                    num_heads, num_clusters, top_k_clusters):
    B, Lq, H = query.shape
    hd = H // num_heads
    scale = hd ** (-0.5)

    # PyTorch nn.Linear stores W as [out, in]; pre-transpose once + bf16 for the MXU.
    wq_t = jnp.asarray(params["wq"].T, jnp.bfloat16)
    wk_t = jnp.asarray(params["wk"].T, jnp.bfloat16)
    wv_t = jnp.asarray(params["wv"].T, jnp.bfloat16)
    wo_t = jnp.asarray(params["wo"].T, jnp.bfloat16)

    # q/k/v activations stay bf16 end-to-end; all reduction / softmax math is f32.
    q = linear(query, wq_t, params["bq"])
    k = linear(key, wk_t, params["bk"])
    v = linear(value, wv_t, params["bv"])

    top_k = min(top_k_clusters, num_clusters)
    merged, attn_weights = sqa_attention(q, k, v, params["centroids"],
                                         scale, top_k, num_heads)

    output = linear(merged, wo_t, params["bo"], out_dtype=jnp.float32)
    return output, attn_weights


if __name__ == "__main__":
    B, Lq, Lk, H, nh, C, topk = 2, 8, 8, 32, 2, 8, 4
    hd = H // nh

    rng = jax.random.PRNGKey(0)
    ks = jax.random.split(rng, 12)
    params = {
        "wq": 0.1 * jax.random.normal(ks[0], (H, H), jnp.float32),
        "bq": 0.1 * jax.random.normal(ks[1], (H,), jnp.float32),
        "wk": 0.1 * jax.random.normal(ks[2], (H, H), jnp.float32),
        "bk": 0.1 * jax.random.normal(ks[3], (H,), jnp.float32),
        "wv": 0.1 * jax.random.normal(ks[4], (H, H), jnp.float32),
        "bv": 0.1 * jax.random.normal(ks[5], (H,), jnp.float32),
        "wo": 0.1 * jax.random.normal(ks[6], (H, H), jnp.float32),
        "bo": 0.1 * jax.random.normal(ks[7], (H,), jnp.float32),
        "centroids": jax.random.normal(ks[8], (nh, C, hd), jnp.float32),
    }

    query = jax.random.normal(ks[9], (B, Lq, H), jnp.float32)
    key_in = jax.random.normal(ks[10], (B, Lk, H), jnp.float32)
    value = jax.random.normal(ks[11], (B, Lk, H), jnp.float32)

    out, weights = sub_quadratic_attention_forward(
        params, query, key_in, value,
        num_heads=nh, num_clusters=C, top_k_clusters=topk)
    jax.block_until_ready((out, weights))

    assert out.shape == (B, Lq, H), out.shape
    assert weights.shape == (B, nh, Lq, Lk), weights.shape
    assert bool(jnp.all(jnp.isfinite(out))) and bool(jnp.all(jnp.isfinite(weights)))
    # softmax rows over the selected tokens must sum to ~1 (exact divide in-kernel)
    assert bool(jnp.all(jnp.abs(jnp.sum(weights, axis=-1) - 1.0) < 1e-3))
    print("KERNEL_OK")
</pallas_src>

<mosaic_0001>
module attributes {stable_mosaic.version = 11 : i64} {
  func.func @_linear_kernel(%arg0: i32, %arg1: i32, %arg2: memref<16x32xf32, #tpu.memory_space<vmem>>, %arg3: memref<32x32xbf16, #tpu.memory_space<vmem>>, %arg4: memref<1x32xf32, #tpu.memory_space<vmem>>, %arg5: memref<16x32xbf16, #tpu.memory_space<vmem>>) attributes {dimension_semantics = [#tpu.dimension_semantics<parallel>, #tpu.dimension_semantics<parallel>], iteration_bounds = array<i64: 1, 1>, scalar_prefetch = 0 : i64, scratch_operands = 0 : i64, tpu.core_type = #tpu.core_type<tc>, window_params = [{transform_indices = @transform_0, window_bounds = array<i64: 16, 32>}, {transform_indices = @transform_1, window_bounds = array<i64: 32, 32>}, {transform_indices = @transform_2, window_bounds = array<i64: 1, 32>}, {transform_indices = @transform_3, window_bounds = array<i64: 16, 32>}]} {
    %c0 = arith.constant 0 : index
    %c0_0 = arith.constant 0 : index
    %0 = vector.load %arg2[%c0, %c0_0] : memref<16x32xf32, #tpu.memory_space<vmem>>, vector<16x32xf32>
    %1 = arith.truncf %0 : vector<16x32xf32> to vector<16x32xbf16>
    %c0_1 = arith.constant 0 : index
    %c0_2 = arith.constant 0 : index
    %2 = vector.load %arg3[%c0_1, %c0_2] : memref<32x32xbf16, #tpu.memory_space<vmem>>, vector<32x32xbf16>
    %cst = arith.constant dense<0.000000e+00> : vector<16x32xf32>
    %3 = tpu.matmul %1, %2, %cst {dimension_numbers = #tpu.dot_dimension_numbers<[1], [0], [0], [1], [0, 0, 1, 1], [], []>} : vector<16x32xbf16>, vector<32x32xbf16>, vector<16x32xf32> -> vector<16x32xf32>
    %c0_3 = arith.constant 0 : index
    %c0_4 = arith.constant 0 : index
    %4 = vector.load %arg4[%c0_3, %c0_4] : memref<1x32xf32, #tpu.memory_space<vmem>>, vector<1x32xf32>
    %5 = vector.broadcast %4 : vector<1x32xf32> to vector<16x32xf32>
    %6 = arith.addf %3, %5 : vector<16x32xf32>
    %7 = arith.truncf %6 : vector<16x32xf32> to vector<16x32xbf16>
    %c0_5 = arith.constant 0 : index
    %c0_6 = arith.constant 0 : index
    %8 = vector.load %arg5[%c0_5, %c0_6] : memref<16x32xbf16, #tpu.memory_space<vmem>>, vector<16x32xbf16>
    tpu.vector_store %arg5[%c0_5, %c0_6], %7 {strides = array<i32>} : memref<16x32xbf16, #tpu.memory_space<vmem>>, vector<16x32xbf16>,
    return
  }
  func.func @transform_0(%arg0: i32, %arg1: i32) -> (i32, i32) {
    %c0_i32 = arith.constant 0 : i32
    %c0_i32_0 = arith.constant 0 : i32
    return %arg0, %c0_i32 : i32, i32
  }
  func.func @transform_1(%arg0: i32, %arg1: i32) -> (i32, i32) {
    %c0_i32 = arith.constant 0 : i32
    %c0_i32_0 = arith.constant 0 : i32
    return %c0_i32, %arg1 : i32, i32
  }
  func.func @transform_2(%arg0: i32, %arg1: i32) -> (i32, i32) {
    %c0_i32 = arith.constant 0 : i32
    %c0_i32_0 = arith.constant 0 : i32
    return %c0_i32, %arg1 : i32, i32
  }
  func.func @transform_3(%arg0: i32, %arg1: i32) -> (i32, i32) {
    %c0_i32 = arith.constant 0 : i32
    return %arg0, %arg1 : i32, i32
  }
}

</mosaic_0001>

<llo_original>
// kernel: tpu_custom_call.1
$region0: #{tpu_custom_call.1}
  #allocation0 [shape = 'u32[]', space=smem, size = 0x4, offset = 0x4, fixed_abs, tag = 'smem constant byte address 0x4 - core index']
  #allocation1 [shape = 'u32[144,128]{1,0:T(1,128)}', space=vmem, size = 0x12000, scoped, tag = 'internal scratch']
  %s0 = inlined_call_operand.hbm [shape: f32[16,32], index: 0, kind: input, shape index: {}]
  %s1 = inlined_call_operand.hbm [shape: bf16[32,32], index: 1, kind: input, shape index: {}]
  %s2 = inlined_call_operand.vmem [shape: f32[1,32], index: 2, kind: input, shape index: {}]
  %s3 = inlined_call_operand.hbm [shape: bf16[16,32], index: 3, kind: output, shape index: {}]
  %s4 = sld [smem:[#allocation0]]
  $region30: #{tpu_custom_call.1} parent=0
    _
  %s6 = ssub.s32 1, %s4
  %s7 = scalar_select 0, %s6, %s4
  $region1: #{tpu_custom_call.1} parent=0
    #allocation2 [shape = 'u8[8192]{0}', space=vmem, size = 0x2000, scoped, tag = 'input window, operand 0, single buffered']
    #allocation3 [shape = 's32[1]{0}', space=sflag, size = 0x4, scoped, tag = 'scoped memory for tpu_custom_call.1']
    #allocation4 [shape = 's32[1]{0}', space=sflag, size = 0x4, scoped, tag = 'scoped memory for tpu_custom_call.1']
    #allocation5 [shape = 'u8[8192]{0}', space=vmem, size = 0x2000, scoped, tag = 'input window, operand 1, single buffered']
    #allocation6 [shape = 's32[1]{0}', space=sflag, size = 0x4, scoped, tag = 'scoped memory for tpu_custom_call.1']
    #allocation7 [shape = 'u8[4096]{0}', space=vmem, size = 0x1000, scoped, tag = 'output window, operand 0, single buffered']
    %8 = vsyncpa [#allocation3], 0
    %9 = vsyncpa [#allocation6], 0
    %10 = vsyncpa [#allocation4], 0
    // Predicated region
    $region2: #{tpu_custom_call.1} parent=1 // pred_check
      _
    $region3: #{tpu_custom_call.1} parent=1 // pred_check_branch
      %12 = sbr.rel (0) target = $region5
    $region4: #{tpu_custom_call.1} parent=1 // pred_region
      %s14 = ssub.s32 256, 256
      %15 = vsyncadd [#allocation3], %s14
      %s16 = sshll.u32 [#allocation2], 4
      %s17 = int_to_ptr.vmem [resolvable:$true] %s16
      %22 = dma.hbm_to_vmem [thread:$0]  %s0, 256, %s17, [#allocation3], 128, 128, 8
    $region5: #{tpu_custom_call.1} parent=1 // pred_fallthru
      _
    // Predicated region
    $region6: #{tpu_custom_call.1} parent=1 // pred_check
      _
    $region7: #{tpu_custom_call.1} parent=1 // pred_check_branch
      %24 = sbr.rel (0) target = $region9
    $region8: #{tpu_custom_call.1} parent=1 // pred_region
      %s26 = ssub.s32 256, 256
      %27 = vsyncadd [#allocation6], %s26
      %s28 = sshll.u32 [#allocation5], 4
      %s29 = int_to_ptr.vmem [resolvable:$true] %s28
      %34 = dma.hbm_to_vmem [thread:$0]  %s1, 256, %s29, [#allocation6], 64, 64, 4
    $region9: #{tpu_custom_call.1} parent=1 // pred_fallthru
      _
    // Predicated region
    $region10: #{tpu_custom_call.1} parent=1 // pred_check
      _
    $region11: #{tpu_custom_call.1} parent=1 // pred_check_branch
      %36 = sbr.rel (0) target = $region13
    $region12: #{tpu_custom_call.1} parent=1 // pred_region
      _
    $region13: #{tpu_custom_call.1} parent=1 // pred_fallthru
      _
    // Predicated region
    $region14: #{tpu_custom_call.1} parent=1 // pred_check
      _
    $region15: #{tpu_custom_call.1} parent=1 // pred_check_branch
      %38 = sbr.rel (0) target = $region17
    $region16: #{tpu_custom_call.1} parent=1 // pred_region
      %39 = dma.done [#allocation3], 256
    $region17: #{tpu_custom_call.1} parent=1 // pred_fallthru
      _
    // Predicated region
    $region18: #{tpu_custom_call.1} parent=1 // pred_check
      _
    $region19: #{tpu_custom_call.1} parent=1 // pred_check_branch
      %41 = sbr.rel (0) target = $region21
    $region20: #{tpu_custom_call.1} parent=1 // pred_region
      %42 = dma.done [#allocation6], 256
    $region21: #{tpu_custom_call.1} parent=1 // pred_fallthru
      _
    %v44 = vld [vmem:[#allocation2] sm:$0xff]
    %v45 = vld [vmem:[#allocation2 + $0x8] sm:$0xff]
    %v46 = vpack.c.bf16 %v45, %v44
    %v47 = vld [vmem:[#allocation5] sm:$0xf]
    %v48 = vld [vmem:[#allocation5 + $0x4] sm:$0xf]
    %v49 = vld [vmem:[#allocation5 + $0x8] sm:$0xf]
    %v50 = vld [vmem:[#allocation5 + $0xc] sm:$0xf]
    %v51 = vld [vmem:[%s2] sm:$0x1]
    %v53 = vlaneseq
    %v54 = vshrl.u32 %v53, 7
    %v55 = vsub.s32 0, %v54
    %v56 = vrot.slane %v51, %v55
    %v62 = vunpack.c.l.b16 %v47
    %v63 = vunpack.c.l.b16 %v48
    %v64 = vunpack.c.l.b16 %v49
    %v65 = vunpack.c.l.b16 %v50
    %v66 = vpack.c.b16 %v63, %v62
    %v67 = vpack.c.b16 %v65, %v64
    %vm70 = vcmask 261120
    %v72 = vsel %vm70, %v46, 0
    %74 = vmatprep.subr.bf16.mxu0 0
    %75 = vmatpush1.bf16.msra.mxu0 %v66
    %76 = vmatprep.subr.bf16.mxu0 0
    %77 = vmatpush1.bf16.msra.mxu0 %v67
    %78 = vmatprep.subr.bf16.mxu0 0
    %79 = vmatpush1.bf16.msra.mxu0 0
    %80 = vmatprep.subr.bf16.mxu0 0
    %81 = vmatpush1.bf16.msra.mxu0 0
    %82 = vmatprep.subr.bf16.mxu0 0
    %83 = vmatpush1.bf16.msra.mxu0 0
    %84 = vmatprep.subr.bf16.mxu0 0
    %85 = vmatpush1.bf16.msra.mxu0 0
    %86 = vmatprep.subr.bf16.mxu0 0
    %87 = vmatpush1.bf16.msra.mxu0 0
    %88 = vmatprep.subr.bf16.mxu0 0
    %89 = vmatpush1.bf16.msra.mxu0 0
    %90 = vmatprep.subr.bf16.mxu0 0
    %91 = vmatpush1.bf16.msra.mxu0 0
    %92 = vmatprep.subr.bf16.mxu0 0
    %93 = vmatpush1.bf16.msra.mxu0 0
    %94 = vmatprep.subr.bf16.mxu0 0
    %95 = vmatpush1.bf16.msra.mxu0 0
    %96 = vmatprep.subr.bf16.mxu0 0
    %97 = vmatpush1.bf16.msra.mxu0 0
    %98 = vmatprep.subr.bf16.mxu0 0
    %99 = vmatpush1.bf16.msra.mxu0 0
    %100 = vmatprep.subr.bf16.mxu0 0
    %101 = vmatpush1.bf16.msra.mxu0 0
    %102 = vmatprep.subr.bf16.mxu0 0
    %103 = vmatpush1.bf16.msra.mxu0 0
    %104 = vmatprep.subr.bf16.mxu0 0
    %105 = vmatpush1.bf16.msra.mxu0 0
    %106 = vmatprep.mubr.bf16.mxu0 0
    %107 = vmatmul.mubr.bf16.gmra.mrb[0].mxu0 %v72
    %v108 = vpop.f32.mrb[0].mxu0
    %v109 = vadd.f32 %v56, %v108
    %v110 = vpop.f32.mrb[0].mxu0
    %v111 = vpop.f32.mrb[0].mxu0
    %v112 = vadd.f32 %v56, %v111
    %v113 = vpop.f32.mrb[0].mxu0
    %114 = vdwg.mxu0
    %v115 = vpack.c.bf16 %v112, %v109
    %v117 = vunpack.c.l.b16 %v115
    %v118 = vunpack.c.h.b16 %v115
    %v119 = vpack.c.b16 %v117, %v117
    %v120 = vpack.c.b16 %v118, %v118
    %vm123 = vcmask 257024
    %124 = vst.msk [vmem:[#allocation7] sm:$0xf] %vm123, %v119
    %125 = vst.msk [vmem:[#allocation7 + $0x4] sm:$0xf] %vm123, %v120
    // Predicated region
    $region22: #{tpu_custom_call.1} parent=1 // pred_check
      _
    $region23: #{tpu_custom_call.1} parent=1 // pred_check_branch
      %127 = sbr.rel (0) target = $region25
    $region24: #{tpu_custom_call.1} parent=1 // pred_region
      %s129 = ssub.s32 128, 128
      %130 = vsyncadd [#allocation4], %s129
      %s131 = sshll.u32 [#allocation7], 4
      %s132 = int_to_ptr.vmem [resolvable:$true] %s131
      %137 = dma.vmem_to_hbm [thread:$0]  %s132, 128, %s3, [#allocation4], 64, 64, 4
    $region25: #{tpu_custom_call.1} parent=1 // pred_fallthru
      _
    // Predicated region
    $region26: #{tpu_custom_call.1} parent=1 // pred_check
      _
    $region27: #{tpu_custom_call.1} parent=1 // pred_check_branch
      %139 = sbr.rel (0) target = $region29
    $region28: #{tpu_custom_call.1} parent=1 // pred_region
      %140 = dma.done [#allocation4], 128
    $region29: #{tpu_custom_call.1} parent=1 // pred_fallthru
      _
    %141 = vsyncpa [#allocation3], 1
    %142 = vsyncpa [#allocation6], 1
    %143 = vsyncpa [#allocation4], 1

</llo_original>
